<compile_context>
chip_gen: v6e
topology: v6e:2x2x1
jax: 0.10.0
libtpu: 0.0.40
codegen_flags: <defaults>
</compile_context>

<pallas_src>
import jax
import jax.numpy as jnp
from jax import lax
from jax.experimental import pallas as pl
from jax.experimental.pallas import tpu as pltpu

LANES = 128
# ~2 MiB per input block; 2 inputs x 2 pipeline buffers = 8 MiB footprint.
DEFAULT_TARGET_BLOCK_BYTES = 2 * 1024 * 1024
VMEM_LIMIT_BYTES = 32 * 1024 * 1024       # <= scoped default on v6e/v7x, < physical everywhere
N_SPLITS = 2                              # leading "parallel" axis -> 2 TCs on v7x


def _make_mse_kernel(*, tile_rows, rows, bpc, first_masked, any_masked, n_chunks):
    """Build the kernel with all static configuration closed over."""
    chunk_rows = tile_rows // n_chunks
    assert chunk_rows * n_chunks == tile_rows and chunk_rows % 8 == 0

    def kernel(x_ref, y_ref, o_ref):
        c = pl.program_id(0)              # split (parallel) axis
        i = pl.program_id(1)              # block-within-split (arbitrary) axis
        logical_block = c * bpc + i       # logical block id over the row range

        # The output block (1, 8, 128) is the accumulator: it stays VMEM-resident
        # across the inner axis (its block index only depends on c).
        @pl.when(i == 0)
        def _():
            o_ref[...] = jnp.zeros_like(o_ref)

        def accumulate(masked):
            row_base = logical_block * tile_rows
            for j in range(n_chunks):     # static chunking bounds vreg pressure
                r0 = j * chunk_rows
                xs = x_ref[pl.ds(r0, chunk_rows), :].astype(jnp.float32)
                ys = y_ref[pl.ds(r0, chunk_rows), :].astype(jnp.float32)
                d = xs - ys
                sq = d * d
                if masked:
                    # Mask by *logical* row index: covers both the ragged last
                    # block and fully out-of-range (clamped) blocks.
                    ridx = (row_base + r0
                            + lax.broadcasted_iota(jnp.int32, (chunk_rows, LANES), 0))
                    sq = jnp.where(ridx < rows, sq, jnp.float32(0.0))
                # Pure-VPU sublane fold into the (8, 128) accumulator block.
                o_ref[...] += jnp.sum(
                    sq.reshape(chunk_rows // 8, 8, LANES), axis=0
                ).reshape(1, 8, LANES)

        if any_masked:
            # Only the trailing block(s) pay for iota + compare + select.
            @pl.when(logical_block >= first_masked)
            def _():
                accumulate(masked=True)

            @pl.when(logical_block < first_masked)
            def _():
                accumulate(masked=False)
        else:
            accumulate(masked=False)

    return kernel


def lmse(inputs, targets, *, target_block_bytes=DEFAULT_TARGET_BLOCK_BYTES):
    """Pallas implementation of LMSE.forward: returns a scalar float32 loss."""
    assert inputs.shape == targets.shape
    n_elems = inputs.size
    if n_elems == 0:
        return jnp.float32(0.0)

    itemsize = jnp.dtype(inputs.dtype).itemsize
    # Sublane packing multiple: f32 -> 8, bf16 -> 16, int8/fp8 -> 32.
    sublane_mult = 8 * max(1, 4 // itemsize)

    x = inputs.reshape(-1)   # native dtype; cast happens per-chunk in the kernel
    y = targets.reshape(-1)

    n_main = (n_elems // LANES) * LANES
    rows = n_main // LANES

    if n_main != n_elems:
        # TODO(synk): x[:n_main]/y[:n_main] below force near-full input copies
        # (can't alias a sub-buffer into pallas_call); a 1-D-block kernel with
        # element-granularity masking would avoid them. Typical image shapes
        # (n_elems % 128 == 0) take the copy-free path.
        tail_sq = jnp.sum(
            (x[n_main:].astype(jnp.float32) - y[n_main:].astype(jnp.float32)) ** 2)
        x = x[:n_main]
        y = y[:n_main]
    else:
        tail_sq = jnp.float32(0.0)

    if rows < sublane_mult:
        # Tiny input (< sublane_mult*128 elements): kernel overhead dominates.
        if rows > 0:
            tail_sq = tail_sq + jnp.sum(
                (x.astype(jnp.float32) - y.astype(jnp.float32)) ** 2)
        return (tail_sq / jnp.float32(n_elems)).astype(jnp.float32)

    # ---- Tile selection (bytes-targeted, dtype-packing aware) ----
    max_rows = max(sublane_mult, target_block_bytes // (LANES * itemsize))
    max_rows = (max_rows // sublane_mult) * sublane_mult
    if rows >= LANES:
        tile_rows = min(max_rows, (rows // LANES) * LANES)
    else:
        tile_rows = min(max_rows, (rows // sublane_mult) * sublane_mult)

    num_blocks = pl.cdiv(rows, tile_rows)
    n_splits = N_SPLITS if num_blocks >= 2 else 1
    bpc = pl.cdiv(num_blocks, n_splits)          # blocks per split
    total_grid_blocks = n_splits * bpc
    first_masked = rows // tile_rows             # logical blocks >= this need masking
    any_masked = first_masked < total_grid_blocks
    n_chunks = 8 if (tile_rows % (8 * sublane_mult) == 0) else 1

    x2 = x.reshape(rows, LANES)                  # free reshape (contiguous)
    y2 = y.reshape(rows, LANES)

    kernel = _make_mse_kernel(
        tile_rows=tile_rows, rows=rows, bpc=bpc,
        first_masked=first_masked, any_masked=any_masked, n_chunks=n_chunks)

    def in_map(c, i):
        # Clamp fully out-of-range logical blocks onto the last valid block;
        # the kernel masks their contribution to zero by logical row index.
        return (jnp.minimum(c * bpc + i, num_blocks - 1), 0)

    partials = pl.pallas_call(
        kernel,
        out_shape=jax.ShapeDtypeStruct((n_splits, 8, LANES), jnp.float32),
        grid_spec=pltpu.PrefetchScalarGridSpec(
            num_scalar_prefetch=0,
            grid=(n_splits, bpc),
            in_specs=[
                pl.BlockSpec((tile_rows, LANES), in_map),
                pl.BlockSpec((tile_rows, LANES), in_map),
            ],
            out_specs=pl.BlockSpec((1, 8, LANES), lambda c, i: (c, 0, 0)),
        ),
        compiler_params=pltpu.CompilerParams(
            dimension_semantics=("parallel", "arbitrary"),
            vmem_limit_bytes=VMEM_LIMIT_BYTES,
        ),
    )(x2, y2)

    total_sq = jnp.sum(partials) + tail_sq
    # mean over batch of per-image MSE == total sum / total number of elements
    return (total_sq / jnp.float32(n_elems)).astype(jnp.float32)


def _ref_lmse(inputs, targets):
    a = inputs.astype(jnp.float32)
    b = targets.astype(jnp.float32)
    axes = tuple(range(1, a.ndim))
    return jnp.mean(jnp.mean((a - b) ** 2, axis=axes))


if __name__ == "__main__":
    key = jax.random.PRNGKey(0)

    # 1) Main demo shape: aligned, single block, no masking.
    k1, k2, key = jax.random.split(key, 3)
    B, C, H, W = 2, 4, 16, 16
    inputs = jax.random.normal(k1, (B, C, H, W), dtype=jnp.float32)
    targets = jax.random.normal(k2, (B, C, H, W), dtype=jnp.float32)
    loss = jax.block_until_ready(lmse(inputs, targets))
    ref = _ref_lmse(inputs, targets)
    assert jnp.allclose(loss, ref, rtol=1e-5, atol=1e-6), (loss, ref)

    # 2) Ragged shape: <128-element tail + partially-masked last block.
    k1, k2, key = jax.random.split(key, 3)
    a = jax.random.normal(k1, (2, 3, 30, 20), dtype=jnp.float32)
    b = jax.random.normal(k2, (2, 3, 30, 20), dtype=jnp.float32)
    loss2 = jax.block_until_ready(lmse(a, b))
    ref2 = _ref_lmse(a, b)
    assert jnp.allclose(loss2, ref2, rtol=1e-5, atol=1e-6), (loss2, ref2)

    # 3) Forced tiny blocks: odd block count -> exercises the clamped
    #    out-of-range block on the 2-way split.
    k1, k2, key = jax.random.split(key, 3)
    a = jax.random.normal(k1, (2, 4, 24, 16), dtype=jnp.float32)
    b = jax.random.normal(k2, (2, 4, 24, 16), dtype=jnp.float32)
    loss3 = jax.block_until_ready(lmse(a, b, target_block_bytes=8 * LANES * 4))
    ref3 = _ref_lmse(a, b)
    assert jnp.allclose(loss3, ref3, rtol=1e-5, atol=1e-6), (loss3, ref3)

    # 4) bf16 inputs: sublane packing multiple of 16.
    k1, k2, key = jax.random.split(key, 3)
    a = jax.random.normal(k1, (B, C, H, W), dtype=jnp.bfloat16)
    b = jax.random.normal(k2, (B, C, H, W), dtype=jnp.bfloat16)
    loss4 = jax.block_until_ready(lmse(a, b))
    ref4 = _ref_lmse(a, b)
    assert jnp.allclose(loss4, ref4, rtol=1e-4, atol=1e-5), (loss4, ref4)

    print("KERNEL_OK")
</pallas_src>

<mosaic_0001>
module attributes {stable_mosaic.version = 11 : i64} {
  func.func @kernel(%arg0: i32, %arg1: i32, %arg2: memref<16x128xf32, #tpu.memory_space<vmem>>, %arg3: memref<16x128xf32, #tpu.memory_space<vmem>>, %arg4: memref<1x8x128xf32, #tpu.memory_space<vmem>>) attributes {dimension_semantics = [#tpu.dimension_semantics<parallel>, #tpu.dimension_semantics<arbitrary>], iteration_bounds = array<i64: 1, 1>, scalar_prefetch = 0 : i64, scratch_operands = 0 : i64, tpu.core_type = #tpu.core_type<tc>, window_params = [{transform_indices = @transform_0, window_bounds = array<i64: 16, 128>}, {transform_indices = @transform_1, window_bounds = array<i64: 16, 128>}, {transform_indices = @transform_2, window_bounds = array<i64: 1, 8, 128>}]} {
    %c0_i32 = arith.constant 0 : i32
    %0 = arith.cmpi eq, %arg1, %c0_i32 : i32
    %1 = arith.extui %0 : i1 to i32
    %c0_i32_0 = arith.constant 0 : i32
    %2 = arith.cmpi ne, %1, %c0_i32_0 : i32
    scf.if %2 {
      %cst_10 = arith.constant 0.000000e+00 : f32
      %13 = vector.broadcast %cst_10 : f32 to vector<1x8x128xf32>
      %c0_11 = arith.constant 0 : index
      %c0_12 = arith.constant 0 : index
      %c0_13 = arith.constant 0 : index
      %14 = vector.load %arg4[%c0_11, %c0_12, %c0_13] : memref<1x8x128xf32, #tpu.memory_space<vmem>>, vector<1x8x128xf32>
      tpu.vector_store %arg4[%c0_11, %c0_12, %c0_13], %13 {strides = array<i32>} : memref<1x8x128xf32, #tpu.memory_space<vmem>>, vector<1x8x128xf32>,
    } else {
    }
    %c0 = arith.constant 0 : index
    %c0_1 = arith.constant 0 : index
    %3 = vector.load %arg2[%c0, %c0_1] : memref<16x128xf32, #tpu.memory_space<vmem>>, vector<16x128xf32>
    %c0_2 = arith.constant 0 : index
    %c0_3 = arith.constant 0 : index
    %4 = vector.load %arg3[%c0_2, %c0_3] : memref<16x128xf32, #tpu.memory_space<vmem>>, vector<16x128xf32>
    %5 = arith.subf %3, %4 : vector<16x128xf32>
    %6 = arith.mulf %5, %5 : vector<16x128xf32>
    %c0_4 = arith.constant 0 : index
    %c0_5 = arith.constant 0 : index
    %c0_6 = arith.constant 0 : index
    %7 = vector.load %arg4[%c0_4, %c0_5, %c0_6] : memref<1x8x128xf32, #tpu.memory_space<vmem>>, vector<1x8x128xf32>
    %8 = vector.shape_cast %6 : vector<16x128xf32> to vector<2x8x128xf32>
    %cst = arith.constant dense<0.000000e+00> : vector<8x128xf32>
    %9 = vector.multi_reduction <add>, %8, %cst [0] : vector<2x8x128xf32> to vector<8x128xf32>
    %10 = vector.shape_cast %9 : vector<8x128xf32> to vector<1x8x128xf32>
    %11 = arith.addf %7, %10 : vector<1x8x128xf32>
    %c0_7 = arith.constant 0 : index
    %c0_8 = arith.constant 0 : index
    %c0_9 = arith.constant 0 : index
    %12 = vector.load %arg4[%c0_7, %c0_8, %c0_9] : memref<1x8x128xf32, #tpu.memory_space<vmem>>, vector<1x8x128xf32>
    tpu.vector_store %arg4[%c0_7, %c0_8, %c0_9], %11 {strides = array<i32>} : memref<1x8x128xf32, #tpu.memory_space<vmem>>, vector<1x8x128xf32>,
    return
  }
  func.func @transform_0(%arg0: i32, %arg1: i32) -> (i32, i32) {
    %c1_i32 = arith.constant 1 : i32
    %0 = arith.muli %arg0, %c1_i32 : i32
    %1 = arith.addi %0, %arg1 : i32
    %c0_i32 = arith.constant 0 : i32
    %2 = arith.minsi %1, %c0_i32 : i32
    %c0_i32_0 = arith.constant 0 : i32
    %c0_i32_1 = arith.constant 0 : i32
    return %2, %c0_i32_0 : i32, i32
  }
  func.func @transform_1(%arg0: i32, %arg1: i32) -> (i32, i32) {
    %c1_i32 = arith.constant 1 : i32
    %0 = arith.muli %arg0, %c1_i32 : i32
    %1 = arith.addi %0, %arg1 : i32
    %c0_i32 = arith.constant 0 : i32
    %2 = arith.minsi %1, %c0_i32 : i32
    %c0_i32_0 = arith.constant 0 : i32
    %c0_i32_1 = arith.constant 0 : i32
    return %2, %c0_i32_0 : i32, i32
  }
  func.func @transform_2(%arg0: i32, %arg1: i32) -> (i32, i32, i32) {
    %c0_i32 = arith.constant 0 : i32
    %c0_i32_0 = arith.constant 0 : i32
    %c0_i32_1 = arith.constant 0 : i32
    return %arg0, %c0_i32, %c0_i32_0 : i32, i32, i32
  }
}

</mosaic_0001>

<llo_original>
// kernel: tpu_custom_call.1
$region0: #{tpu_custom_call.1}
  #allocation0 [shape = 'u32[]', space=smem, size = 0x4, offset = 0x4, fixed_abs, tag = 'smem constant byte address 0x4 - core index']
  #allocation1 [shape = 'u32[144,128]{1,0:T(1,128)}', space=vmem, size = 0x12000, scoped, tag = 'internal scratch']
  %s0 = inlined_call_operand.hbm [shape: f32[16,128], index: 0, kind: input, shape index: {}]
  %s1 = inlined_call_operand.hbm [shape: f32[16,128], index: 1, kind: input, shape index: {}]
  %s2 = inlined_call_operand.hbm [shape: f32[1,8,128], index: 2, kind: output, shape index: {}]
  %s3 = sld [smem:[#allocation0]]
  $region30: #{tpu_custom_call.1} parent=0
    _
  %s5 = ssub.s32 1, %s3
  %s6 = scalar_select 0, %s5, %s3
  $region1: #{tpu_custom_call.1} parent=0
    #allocation2 [shape = 'u8[8192]{0}', space=vmem, size = 0x2000, scoped, tag = 'input window, operand 0, single buffered']
    #allocation3 [shape = 's32[1]{0}', space=sflag, size = 0x4, scoped, tag = 'scoped memory for tpu_custom_call.1']
    #allocation4 [shape = 's32[1]{0}', space=sflag, size = 0x4, scoped, tag = 'scoped memory for tpu_custom_call.1']
    #allocation5 [shape = 'u8[8192]{0}', space=vmem, size = 0x2000, scoped, tag = 'input window, operand 1, single buffered']
    #allocation6 [shape = 's32[1]{0}', space=sflag, size = 0x4, scoped, tag = 'scoped memory for tpu_custom_call.1']
    #allocation7 [shape = 'u8[4096]{0}', space=vmem, size = 0x1000, scoped, tag = 'output window, operand 0, single buffered']
    %7 = vsyncpa [#allocation3], 0
    %8 = vsyncpa [#allocation6], 0
    %9 = vsyncpa [#allocation4], 0
    // Predicated region
    $region2: #{tpu_custom_call.1} parent=1 // pred_check
      _
    $region3: #{tpu_custom_call.1} parent=1 // pred_check_branch
      %11 = sbr.rel (0) target = $region5
    $region4: #{tpu_custom_call.1} parent=1 // pred_region
      %s12 = sadd.s32 0, 0
      %p13 = scmp.lt.s32.totalorder %s12, 0
      %s14 = scalar_select %p13, %s12, 0
      %s15 = smul.u32 2, %s14
      %s17 = ssub.s32 256, 256
      %18 = vsyncadd [#allocation3], %s17
      %s19 = smul.addr %s15, 128
      %s20 = scalar_lea.hbm %s0, %s19
      %s21 = sshll.u32 [#allocation2], 4
      %s22 = int_to_ptr.vmem [resolvable:$true] %s21
      %27 = dma.hbm_to_vmem [thread:$0]  %s20, 256, %s22, [#allocation3], 128, 128, 8
    $region5: #{tpu_custom_call.1} parent=1 // pred_fallthru
      _
    // Predicated region
    $region6: #{tpu_custom_call.1} parent=1 // pred_check
      _
    $region7: #{tpu_custom_call.1} parent=1 // pred_check_branch
      %29 = sbr.rel (0) target = $region9
    $region8: #{tpu_custom_call.1} parent=1 // pred_region
      %s30 = sadd.s32 0, 0
      %p31 = scmp.lt.s32.totalorder %s30, 0
      %s32 = scalar_select %p31, %s30, 0
      %s33 = smul.u32 2, %s32
      %s35 = ssub.s32 256, 256
      %36 = vsyncadd [#allocation6], %s35
      %s37 = smul.addr %s33, 128
      %s38 = scalar_lea.hbm %s1, %s37
      %s39 = sshll.u32 [#allocation5], 4
      %s40 = int_to_ptr.vmem [resolvable:$true] %s39
      %45 = dma.hbm_to_vmem [thread:$0]  %s38, 256, %s40, [#allocation6], 128, 128, 8
    $region9: #{tpu_custom_call.1} parent=1 // pred_fallthru
      _
    // Predicated region
    $region10: #{tpu_custom_call.1} parent=1 // pred_check
      _
    $region11: #{tpu_custom_call.1} parent=1 // pred_check_branch
      %47 = sbr.rel (0) target = $region13
    $region12: #{tpu_custom_call.1} parent=1 // pred_region
      %48 = dma.done [#allocation3], 256
    $region13: #{tpu_custom_call.1} parent=1 // pred_fallthru
      _
    // Predicated region
    $region14: #{tpu_custom_call.1} parent=1 // pred_check
      _
    $region15: #{tpu_custom_call.1} parent=1 // pred_check_branch
      %50 = sbr.rel (0) target = $region17
    $region16: #{tpu_custom_call.1} parent=1 // pred_region
      %51 = dma.done [#allocation6], 256
    $region17: #{tpu_custom_call.1} parent=1 // pred_fallthru
      _
    %s52 = sadd.s32 0, 0
    %p53 = scmp.lt.s32.totalorder %s52, 0
    %s54 = scalar_select %p53, %s52, 0
    %s55 = smul.u32 2, %s54
    %s56 = sadd.s32 0, 0
    %p57 = scmp.lt.s32.totalorder %s56, 0
    %s58 = scalar_select %p57, %s56, 0
    %s59 = smul.u32 2, %s58
    %p60 = scmp.eq.s32.totalorder 0, 0
    // Predicated region
    $region18: #{tpu_custom_call.1} parent=1 // pred_check
      %p61 = pneg %p60
    $region19: #{tpu_custom_call.1} parent=1 // pred_check_branch
      %63 = sbr.rel (%p61) target = $region21
    $region20: #{tpu_custom_call.1} parent=1 // pred_region
      %64 = vst [vmem:[#allocation7] sm:$0xff] 0.0
    $region21: #{tpu_custom_call.1} parent=1 // pred_fallthru
      _
    %v65 = vld [vmem:[#allocation2] sm:$0xff]
    %v66 = vld [vmem:[#allocation2 + $0x8] sm:$0xff]
    %v67 = vld [vmem:[#allocation5] sm:$0xff]
    %v68 = vld [vmem:[#allocation5 + $0x8] sm:$0xff]
    %v69 = vsub.f32 %v65, %v67
    %v70 = vsub.f32 %v66, %v68
    %v71 = vmul.f32 %v69, %v69
    %v72 = vmul.f32 %v70, %v70
    %v73 = vld [vmem:[#allocation7] sm:$0xff]
    %v74 = vadd.f32 %v71, %v72
    %v75 = vadd.f32 %v73, %v74
    %76 = vst [vmem:[#allocation7] sm:$0xff] %v75
    // Predicated region
    $region22: #{tpu_custom_call.1} parent=1 // pred_check
      _
    $region23: #{tpu_custom_call.1} parent=1 // pred_check_branch
      %78 = sbr.rel (0) target = $region25
    $region24: #{tpu_custom_call.1} parent=1 // pred_region
      %s80 = ssub.s32 128, 128
      %81 = vsyncadd [#allocation4], %s80
      %s83 = sshll.u32 [#allocation7], 4
      %s84 = int_to_ptr.vmem [resolvable:$true] %s83
      %86 = dma.vmem_to_hbm [thread:$0]  %s84, 128, %s2, [#allocation4]
    $region25: #{tpu_custom_call.1} parent=1 // pred_fallthru
      _
    // Predicated region
    $region26: #{tpu_custom_call.1} parent=1 // pred_check
      _
    $region27: #{tpu_custom_call.1} parent=1 // pred_check_branch
      %88 = sbr.rel (0) target = $region29
    $region28: #{tpu_custom_call.1} parent=1 // pred_region
      %89 = dma.done [#allocation4], 128
    $region29: #{tpu_custom_call.1} parent=1 // pred_fallthru
      _
    %90 = vsyncpa [#allocation3], 1
    %91 = vsyncpa [#allocation6], 1
    %92 = vsyncpa [#allocation4], 1

</llo_original>
